<compile_context>
chip_gen: v7x
topology: tpu7x:2x2x1
jax: 0.10.0
libtpu: 0.0.40
codegen_flags: <defaults>
</compile_context>

<pallas_src>
from functools import partial

import jax
import jax.numpy as jnp
from jax import lax
from jax.experimental import pallas as pl
from jax.experimental.pallas import tpu as pltpu


_LANE = 128
_BLOCK_BUDGET_BYTES = 2 * 1024 * 1024     # target payload/block (~85%+ of HBM roofline)
_MAX_FUSED_BLOCK_BYTES = 3 * 1024 * 1024  # above this at tb=1, take the HW-chunked path
_VMEM_LIMIT_BYTES = 32 * 1024 * 1024      # > v5e 16 MiB default, <= half v7x physical


def _round_up(a: int, b: int) -> int:
    return (a + b - 1) // b * b


def _sublane_multiple(dtype) -> int:
    # Sub-32-bit dtypes pack along sublanes: f32 -> 8, bf16/f16 -> 16, int8/fp8 -> 32.
    return max(8, 32 // jnp.dtype(dtype).itemsize)


# --------------------------------------------------------------------------------------
# Fused single-pass path: one block = (tb, C, HW)
# --------------------------------------------------------------------------------------
def _fused_kernel(x_ref, w_ref, o_ref):
    # x_ref / o_ref: (tb, C, HW); w_ref: (C, C) resident.
    # Pass 1: L1 norm over the spatial (lane) axis, accumulated in f32.
    s = jnp.sum(jnp.abs(x_ref[...]), axis=2, dtype=jnp.float32)          # (tb, C)
    # Linear (no bias): y[n, o] = sum_i s[n, i] * w[o, i]  (trans_b contraction,
    # MXU consumes W directly; exact f32 to match the PyTorch Linear).
    y = lax.dot_general(
        s, w_ref[...].astype(jnp.float32),
        dimension_numbers=(((1,), (1,)), ((), ())),
        precision=lax.Precision.HIGHEST,
        preferred_element_type=jnp.float32)                              # (tb, C)
    gate = jax.nn.sigmoid(y).astype(o_ref.dtype)                         # (tb, C)
    # Pass 2: re-read the VMEM-resident block (cheap) instead of holding the whole
    # multi-MiB tile live across the reduce + matmul, and apply the gate.
    o_ref[...] = gate[:, :, None] * x_ref[...]


def _fused_path(x_flat, w, plane_bytes):
    N, C, HW = x_flat.shape
    # Batch tile: fill ~_BLOCK_BUDGET_BYTES of (sublane/lane padded) VMEM per block,
    # but keep the grid >= min(N, 8) steps so the DMA pipeline has depth and both
    # v7x TensorCores get several blocks each.
    tb = max(1, _BLOCK_BUDGET_BYTES // plane_bytes)
    tb = min(tb, max(1, pl.cdiv(N, 8)), N)
    grid = (pl.cdiv(N, tb),)

    # NOTE: if N % tb != 0, the last block's out-of-bounds rows hold stale VMEM data.
    # That is safe: batch rows are fully independent (per-row L1 sum, per-row gate,
    # per-row multiply), so garbage rows only produce outputs Pallas discards.
    return pl.pallas_call(
        _fused_kernel,
        out_shape=jax.ShapeDtypeStruct((N, C, HW), x_flat.dtype),
        grid_spec=pltpu.PrefetchScalarGridSpec(
            num_scalar_prefetch=0,
            grid=grid,
            in_specs=[
                pl.BlockSpec((tb, C, HW), lambda n: (n, 0, 0)),   # x batch tile
                pl.BlockSpec((C, C), lambda n: (0, 0)),           # weight, resident
            ],
            out_specs=pl.BlockSpec((tb, C, HW), lambda n: (n, 0, 0)),
        ),
        compiler_params=pltpu.CompilerParams(
            dimension_semantics=("parallel",),
            vmem_limit_bytes=_VMEM_LIMIT_BYTES,
        ),
    )(x_flat, w)


# --------------------------------------------------------------------------------------
# HW-chunked two-pass fallback for slabs that would not fit as a single block.
# --------------------------------------------------------------------------------------
def _l1_sum_kernel(x_ref, s_ref, *, hw, chunk, ragged):
    # x_ref: (1, C, chunk); s_ref: (1, 1, C) f32 accumulator (resident over the k axis).
    k = pl.program_id(1)

    @pl.when(k == 0)
    def _init():
        s_ref[...] = jnp.zeros_like(s_ref)

    x = jnp.abs(x_ref[...])
    if ragged:
        # Mask the out-of-bounds tail of the last HW chunk (stale VMEM data there
        # would otherwise contaminate the L1 sum).
        pos = lax.broadcasted_iota(jnp.int32, x.shape, 2) + k * chunk
        x = jnp.where(pos < hw, x, jnp.zeros((), x.dtype))
    s_ref[...] += jnp.sum(x, axis=2, dtype=jnp.float32)[:, None, :]


def _apply_gate_kernel(s_ref, w_ref, x_ref, o_ref):
    # s_ref: (1, 1, C) f32; w_ref: (C, C); x_ref / o_ref: (1, C, chunk).
    # The (1, C) x (C, C) gate matmul is negligible, so it is simply recomputed per
    # chunk (no scratch / pl.when needed).
    y = lax.dot_general(
        s_ref[0], w_ref[...].astype(jnp.float32),
        dimension_numbers=(((1,), (1,)), ((), ())),
        precision=lax.Precision.HIGHEST,
        preferred_element_type=jnp.float32)                              # (1, C)
    gate = jax.nn.sigmoid(y).astype(o_ref.dtype)
    o_ref[...] = gate[:, :, None] * x_ref[...]


def _chunked_path(x_flat, w, chunk_budget_bytes):
    N, C, HW = x_flat.shape
    dtype = x_flat.dtype
    itemsize = jnp.dtype(dtype).itemsize
    c_pad = _round_up(C, _sublane_multiple(dtype))

    # Lane-aligned HW chunk targeting ~chunk_budget_bytes of padded VMEM per block.
    chunk = max(_LANE, (chunk_budget_bytes // (c_pad * itemsize)) // _LANE * _LANE)
    chunk = min(chunk, HW)
    n_chunks = pl.cdiv(HW, chunk)
    ragged = (HW % chunk) != 0
    # TODO(synk): shapes where c_pad * 128 * itemsize still exceeds the VMEM budget
    # (C >~ 16K) would additionally need channel-chunked sums; irrelevant for this module.

    # Pass 1: per-(n, c) L1 sums accumulated over HW chunks.
    sums = pl.pallas_call(
        partial(_l1_sum_kernel, hw=HW, chunk=chunk, ragged=ragged),
        out_shape=jax.ShapeDtypeStruct((N, 1, C), jnp.float32),
        grid_spec=pltpu.PrefetchScalarGridSpec(
            num_scalar_prefetch=0,
            grid=(N, n_chunks),
            in_specs=[pl.BlockSpec((1, C, chunk), lambda n, k: (n, 0, k))],
            out_specs=pl.BlockSpec((1, 1, C), lambda n, k: (n, 0, 0)),
        ),
        compiler_params=pltpu.CompilerParams(
            dimension_semantics=("parallel", "arbitrary"),
            vmem_limit_bytes=_VMEM_LIMIT_BYTES,
        ),
    )(x_flat)

    # Pass 2: gate = sigmoid(sums @ W.T), applied chunk-by-chunk.
    return pl.pallas_call(
        _apply_gate_kernel,
        out_shape=jax.ShapeDtypeStruct((N, C, HW), dtype),
        grid_spec=pltpu.PrefetchScalarGridSpec(
            num_scalar_prefetch=0,
            grid=(N, n_chunks),
            in_specs=[
                pl.BlockSpec((1, 1, C), lambda n, k: (n, 0, 0)),      # per-batch sums
                pl.BlockSpec((C, C), lambda n, k: (0, 0)),            # weight, resident
                pl.BlockSpec((1, C, chunk), lambda n, k: (n, 0, k)),  # x chunk
            ],
            out_specs=pl.BlockSpec((1, C, chunk), lambda n, k: (n, 0, k)),
        ),
        compiler_params=pltpu.CompilerParams(
            dimension_semantics=("parallel", "parallel"),
            vmem_limit_bytes=_VMEM_LIMIT_BYTES,
        ),
    )(sums, w, x_flat)


# --------------------------------------------------------------------------------------
# Public wrapper
# --------------------------------------------------------------------------------------
def channel_atten_layer(x, w, *,
                        fused_block_limit_bytes=_MAX_FUSED_BLOCK_BYTES,
                        chunk_budget_bytes=_BLOCK_BUDGET_BYTES):
    """ChannelAttenLayer forward. x: (N, C, H, W), w: (C, C) -> (N, C, H, W)."""
    N, C, H, W = x.shape
    HW = H * W
    itemsize = jnp.dtype(x.dtype).itemsize

    # VMEM footprint of one batch element's (C, HW) plane inside a block, including
    # (sublane, lane) padding of the last two dims -- this is what double-buffering
    # actually allocates, not the logical C * HW * itemsize.
    plane_bytes = (_round_up(C, _sublane_multiple(x.dtype))
                   * _round_up(HW, _LANE) * itemsize)

    x_flat = x.reshape(N, C, HW)   # free (row-major) reshape, no HBM traffic

    if plane_bytes <= fused_block_limit_bytes:
        out_flat = _fused_path(x_flat, w, plane_bytes)
    else:
        out_flat = _chunked_path(x_flat, w, chunk_budget_bytes)

    return out_flat.reshape(N, C, H, W)


def _reference(x, w):
    # Pure-JAX reference mirroring the PyTorch forward (exact-f32 Linear).
    s = jnp.sum(jnp.abs(x), axis=(2, 3))
    g = jax.nn.sigmoid(jnp.dot(s, w.T, precision=lax.Precision.HIGHEST))
    return g[:, :, None, None] * x


if __name__ == "__main__":
    key = jax.random.PRNGKey(0)
    kx, kw, kx2, kw2 = jax.random.split(key, 4)

    # Tolerances: f32 reduction-order differences over H*W elements dominate; a wrong
    # gate would produce O(0.1..1) errors, so 1e-3 still catches real bugs.
    ATOL = 1e-3
    RTOL = 1e-3

    # --- Test 1: small lane-aligned shape (HW = 256), default fused path -------------
    N, C, H, W = 2, 4, 16, 16
    x = jax.random.normal(kx, (N, C, H, W), dtype=jnp.float32)
    bound = 1.0 / (C ** 0.5)
    w = jax.random.uniform(kw, (C, C), minval=-bound, maxval=bound, dtype=jnp.float32)

    ref = _reference(x, w)
    out = jax.block_until_ready(channel_atten_layer(x, w))
    assert out.shape == (N, C, H, W)
    assert jnp.allclose(out, ref, atol=ATOL, rtol=RTOL), "fused path mismatch"

    # Same inputs through the HW-chunked two-pass fallback (forced at small shape so
    # that code path is validated too: 2 chunks of 128 lanes).
    out_ck = jax.block_until_ready(
        channel_atten_layer(x, w, fused_block_limit_bytes=0, chunk_budget_bytes=4096))
    assert jnp.allclose(out_ck, ref, atol=ATOL, rtol=RTOL), "chunked path mismatch"

    # --- Test 2: unaligned shape (HW = 130, N % tb != 0) ------------------------------
    # Exercises masked tail stores, the ragged last batch block, and the ragged HW
    # chunk mask in the fallback.
    N2, C2, H2, W2 = 9, 6, 10, 13
    x2 = jax.random.normal(kx2, (N2, C2, H2, W2), dtype=jnp.float32)
    bound2 = 1.0 / (C2 ** 0.5)
    w2 = jax.random.uniform(kw2, (C2, C2), minval=-bound2, maxval=bound2,
                            dtype=jnp.float32)

    ref2 = _reference(x2, w2)
    out2 = jax.block_until_ready(channel_atten_layer(x2, w2))
    assert out2.shape == (N2, C2, H2, W2)
    assert jnp.allclose(out2, ref2, atol=ATOL, rtol=RTOL), "fused path mismatch (unaligned)"

    out2_ck = jax.block_until_ready(
        channel_atten_layer(x2, w2, fused_block_limit_bytes=0, chunk_budget_bytes=4096))
    assert jnp.allclose(out2_ck, ref2, atol=ATOL, rtol=RTOL), "chunked path mismatch (unaligned)"

    print("KERNEL_OK")
</pallas_src>

<mosaic_0001>
module attributes {stable_mosaic.version = 11 : i64} {
  func.func @_fused_kernel(%arg0: i32, %arg1: memref<1x4x256xf32, #tpu.memory_space<vmem>>, %arg2: memref<4x4xf32, #tpu.memory_space<vmem>>, %arg3: memref<1x4x256xf32, #tpu.memory_space<vmem>>) attributes {dimension_semantics = [#tpu.dimension_semantics<parallel>], iteration_bounds = array<i64: 2>, scalar_prefetch = 0 : i64, scratch_operands = 0 : i64, tpu.core_type = #tpu.core_type<tc>, window_params = [{transform_indices = @transform_0, window_bounds = array<i64: 1, 4, 256>}, {pipeline_mode = #tpu.pipeline_mode<synchronous>, transform_indices = @transform_1, window_bounds = array<i64: 4, 4>}, {transform_indices = @transform_2, window_bounds = array<i64: 1, 4, 256>}]} {
    %c0 = arith.constant 0 : index
    %c0_0 = arith.constant 0 : index
    %c0_1 = arith.constant 0 : index
    %0 = vector.load %arg1[%c0, %c0_0, %c0_1] : memref<1x4x256xf32, #tpu.memory_space<vmem>>, vector<1x4x256xf32>
    %1 = math.absf %0 : vector<1x4x256xf32>
    %cst = arith.constant dense<0.000000e+00> : vector<1x4xf32>
    %2 = vector.multi_reduction <add>, %1, %cst [2] : vector<1x4x256xf32> to vector<1x4xf32>
    %c0_2 = arith.constant 0 : index
    %c0_3 = arith.constant 0 : index
    %3 = vector.load %arg2[%c0_2, %c0_3] : memref<4x4xf32, #tpu.memory_space<vmem>>, vector<4x4xf32>
    %cst_4 = arith.constant dense<0.000000e+00> : vector<1x4xf32>
    %4 = tpu.matmul %2, %3, %cst_4 {dimension_numbers = #tpu.dot_dimension_numbers<[1], [1], [0], [0], [0, 0, 1, 0], [], []>, precision = #tpu.contract_precision<fp32>} : vector<1x4xf32>, vector<4x4xf32>, vector<1x4xf32> -> vector<1x4xf32>
    %5 = arith.negf %4 : vector<1x4xf32>
    %6 = math.exp %5 : vector<1x4xf32>
    %cst_5 = arith.constant 1.000000e+00 : f32
    %7 = vector.broadcast %cst_5 : f32 to vector<1x4xf32>
    %8 = arith.addf %7, %6 : vector<1x4xf32>
    %9 = arith.divf %7, %8 : vector<1x4xf32>
    %10 = vector.shape_cast %9 : vector<1x4xf32> to vector<1x4x1xf32>
    %c0_6 = arith.constant 0 : index
    %c0_7 = arith.constant 0 : index
    %c0_8 = arith.constant 0 : index
    %11 = vector.load %arg1[%c0_6, %c0_7, %c0_8] : memref<1x4x256xf32, #tpu.memory_space<vmem>>, vector<1x4x256xf32>
    %12 = vector.broadcast %10 : vector<1x4x1xf32> to vector<1x4x256xf32>
    %13 = arith.mulf %12, %11 : vector<1x4x256xf32>
    %c0_9 = arith.constant 0 : index
    %c0_10 = arith.constant 0 : index
    %c0_11 = arith.constant 0 : index
    %14 = vector.load %arg3[%c0_9, %c0_10, %c0_11] : memref<1x4x256xf32, #tpu.memory_space<vmem>>, vector<1x4x256xf32>
    tpu.vector_store %arg3[%c0_9, %c0_10, %c0_11], %13 {strides = array<i32>} : memref<1x4x256xf32, #tpu.memory_space<vmem>>, vector<1x4x256xf32>,
    return
  }
  func.func @transform_0(%arg0: i32) -> (i32, i32, i32) {
    %c0_i32 = arith.constant 0 : i32
    %c0_i32_0 = arith.constant 0 : i32
    %c0_i32_1 = arith.constant 0 : i32
    return %arg0, %c0_i32, %c0_i32_0 : i32, i32, i32
  }
  func.func @transform_1(%arg0: i32) -> (i32, i32) {
    %c0_i32 = arith.constant 0 : i32
    %c0_i32_0 = arith.constant 0 : i32
    %c0_i32_1 = arith.constant 0 : i32
    return %c0_i32, %c0_i32_0 : i32, i32
  }
  func.func @transform_2(%arg0: i32) -> (i32, i32, i32) {
    %c0_i32 = arith.constant 0 : i32
    %c0_i32_0 = arith.constant 0 : i32
    %c0_i32_1 = arith.constant 0 : i32
    return %arg0, %c0_i32, %c0_i32_0 : i32, i32, i32
  }
}

</mosaic_0001>

<llo_original>
// kernel: tpu_custom_call.1
$region0: #{tpu_custom_call.1}
  #allocation0 [shape = 'u32[]', space=smem, size = 0x4, offset = 0x4, fixed_abs, tag = 'smem constant byte address 0x4 - core index']
  #allocation1 [shape = 'u32[144,128]{1,0:T(1,128)}', space=vmem, size = 0x12000, scoped, tag = 'internal scratch']
  %s0 = inlined_call_operand.hbm [shape: f32[2,4,256], index: 0, kind: input, shape index: {}]
  %s1 = inlined_call_operand.hbm [shape: f32[4,4], index: 1, kind: input, shape index: {}]
  %s2 = inlined_call_operand.hbm [shape: f32[2,4,256], index: 2, kind: output, shape index: {}]
  %s3 = sld [smem:[#allocation0]]
  $region49: #{tpu_custom_call.1} parent=0
    _
  %s5 = ssub.s32 1, %s3
  %s6 = scalar_select 0, %s5, %s3
  $region1: #{tpu_custom_call.1} parent=0
    #allocation2 [shape = 'u8[8192]{0}', space=vmem, size = 0x2000, scoped, tag = 'input window, operand 0']
    #allocation3 [shape = 's32[2]{0}', space=sflag, size = 0x8, scoped, tag = 'scoped memory for tpu_custom_call.1']
    #allocation4 [shape = 's32[2]{0}', space=sflag, size = 0x8, scoped, tag = 'scoped memory for tpu_custom_call.1']
    #allocation5 [shape = 'u8[2048]{0}', space=vmem, size = 0x800, scoped, tag = 'input window, operand 1, single buffered']
    #allocation6 [shape = 's32[1]{0}', space=sflag, size = 0x4, scoped, tag = 'scoped memory for tpu_custom_call.1']
    #allocation7 [shape = 'u8[8192]{0}', space=vmem, size = 0x2000, scoped, tag = 'output window, operand 0']
    %7 = vsyncpa [#allocation3], 0
    %s8 = scalar_lea.sflag [#allocation3], 1
    %9 = vsyncpa %s8, 0
    %10 = vsyncpa [#allocation6], 0
    %11 = vsyncpa [#allocation4], 0
    %s12 = scalar_lea.sflag [#allocation4], 1
    %13 = vsyncpa %s12, 0
    loop: start=0, step=1, limit=4
    $region2: #{tpu_custom_call.1} parent=1 // loop_pre_header
      _
    $region3: #{tpu_custom_call.1} parent=1 // loop_header
      %s15 = sphi 0, %s19
      %p16 = scmp.ge.s32.totalorder %s15, 4
      %s25 = sphi 0, %s27
      %s28 = sphi 0, %s25
      %s29 = sphi 0, %s28
      %s45 = sphi 0, %s29
      %s49 = sphi 0, %s49
      %s51 = sphi 0, %s49
      %s52 = sphi 0, %s51
      %s66 = sphi 0, %s52
      %s72 = sphi 0, %s74
      %s75 = sphi 0, %s72
      %s76 = sphi 0, %s75
      %s92 = sphi 0, %s76
    $region4: #{tpu_custom_call.1} parent=1 // loop_header_branch
      %18 = sbr.rel (%p16) target = $region8
    $region5: #{tpu_custom_call.1} parent=1 // loop_body
      %s20 = ssub.s32 %s15, 1
      %s21 = ssub.s32 %s15, 2
      %s22 = sadd.s32 %s15, 1
      %s23 = ssub.s32 %s15, %s22
      %p24 = scmp.eq.s32.totalorder %s23, 0
      %s26 = sadd.s32 %s25, 1
      %s27 = scalar_select %p24, %s25, %s26
      %p30 = pneg %p24
      %p31 = scmp.eq.s32.totalorder %s15, 1
      %p32 = por %p30, %p31
      %p33 = scmp.ne.s32.totalorder %s25, %s28
      %p34 = scmp.eq.s32.totalorder %s15, 0
      %p35 = por %p33, %p34
      %p36 = scmp.ne.s32.totalorder %s25, %s28
      %p37 = scmp.eq.s32.totalorder %s20, 1
      %p38 = por %p36, %p37
      %p39 = scmp.ne.s32.totalorder %s28, %s29
      %p40 = scmp.eq.s32.totalorder %s20, 0
      %p41 = por %p39, %p40
      %p42 = scmp.ne.s32.totalorder %s28, %s29
      %p43 = scmp.eq.s32.totalorder %s21, 1
      %p44 = por %p42, %p43
      %p46 = scmp.ne.s32.totalorder %s29, %s45
      %p47 = scmp.eq.s32.totalorder %s21, 0
      %p48 = por %p46, %p47
      %s50 = sadd.s32 %s49, 1
      %p53 = scmp.eq.s32.totalorder %s15, 1
      %p54 = scmp.ne.s32.totalorder %s49, %s51
      %p55 = scmp.eq.s32.totalorder %s15, 0
      %p56 = por %p54, %p55
      %p57 = scmp.ne.s32.totalorder %s49, %s51
      %p58 = scmp.eq.s32.totalorder %s20, 1
      %p59 = por %p57, %p58
      %p60 = scmp.ne.s32.totalorder %s51, %s52
      %p61 = scmp.eq.s32.totalorder %s20, 0
      %p62 = por %p60, %p61
      %p63 = scmp.ne.s32.totalorder %s51, %s52
      %p64 = scmp.eq.s32.totalorder %s21, 1
      %p65 = por %p63, %p64
      %p67 = scmp.ne.s32.totalorder %s52, %s66
      %p68 = scmp.eq.s32.totalorder %s21, 0
      %p69 = por %p67, %p68
      %s70 = ssub.s32 %s15, %s22
      %p71 = scmp.eq.s32.totalorder %s70, 0
      %s73 = sadd.s32 %s72, 1
      %s74 = scalar_select %p71, %s72, %s73
      %p77 = pneg %p71
      %p78 = scmp.eq.s32.totalorder %s15, 1
      %p79 = por %p77, %p78
      %p80 = scmp.ne.s32.totalorder %s72, %s75
      %p81 = scmp.eq.s32.totalorder %s15, 0
      %p82 = por %p80, %p81
      %p83 = scmp.ne.s32.totalorder %s72, %s75
      %p84 = scmp.eq.s32.totalorder %s20, 1
      %p85 = por %p83, %p84
      %p86 = scmp.ne.s32.totalorder %s75, %s76
      %p87 = scmp.eq.s32.totalorder %s20, 0
      %p88 = por %p86, %p87
      %p89 = scmp.ne.s32.totalorder %s75, %s76
      %p90 = scmp.eq.s32.totalorder %s21, 1
      %p91 = por %p89, %p90
      %p93 = scmp.ne.s32.totalorder %s76, %s92
      %p94 = scmp.eq.s32.totalorder %s21, 0
      %p95 = por %p93, %p94
      %p96 = scmp.le.s32.totalorder 1, %s15
      %p97 = scmp.lt.s32.totalorder %s15, 3
      %p98 = pnand %p96, %p97
      %p99 = pneg %p98
      // Predicated region
      $region9: #{tpu_custom_call.1} parent=5 // pred_check
        _
      $region10: #{tpu_custom_call.1} parent=5 // pred_check_branch
        %101 = sbr.rel (%p98) target = $region12
      $region11: #{tpu_custom_call.1} parent=5 // pred_region
        %s102 = ssub.s32 %s15, 1
        // Predicated region
        $region13: #{tpu_custom_call.1} parent=11 // pred_check
          %p103 = pneg %p62
        $region14: #{tpu_custom_call.1} parent=11 // pred_check_branch
          %105 = sbr.rel (%p103) target = $region16
        $region15: #{tpu_custom_call.1} parent=11 // pred_region
          %s107 = ssub.s32 64, 64
          %108 = vsyncadd [#allocation6], %s107
          %s110 = sshll.u32 [#allocation5], 4
          %s111 = int_to_ptr.vmem [resolvable:$true] %s110
          %113 = dma.hbm_to_vmem [thread:$0]  %s1, 64, %s111, [#allocation6]
        $region16: #{tpu_custom_call.1} parent=11 // pred_fallthru
          _
      $region12: #{tpu_custom_call.1} parent=5 // pred_fallthru
        _
      %p114 = scmp.lt.s32.totalorder %s15, 2
      // Predicated region
      $region17: #{tpu_custom_call.1} parent=5 // pred_check
        %p115 = pneg %p114
      $region18: #{tpu_custom_call.1} parent=5 // pred_check_branch
        %117 = sbr.rel (%p115) target = $region20
      $region19: #{tpu_custom_call.1} parent=5 // pred_region
        // Predicated region
        $region21: #{tpu_custom_call.1} parent=19 // pred_check
          %p118 = pneg %p35
        $region22: #{tpu_custom_call.1} parent=19 // pred_check_branch
          %120 = sbr.rel (%p118) target = $region24
        $region23: #{tpu_custom_call.1} parent=19 // pred_region
          %s121 = sand.u32 %s25, 1
          %s122 = scalar_lea.sflag [#allocation3], %s121
          %s123 = sand.u32 %s25, 1
          %s124 = smul.addr %s123, 8
          %s125 = scalar_lea.vmem [#allocation2], %s124
          %s127 = ssub.s32 128, 128
          %128 = vsyncadd %s122, %s127
          %s129 = smul.addr %s15, 2
          %s130 = smul.addr %s129, 64
          %s131 = scalar_lea.hbm %s0, %s130
          %s133 = sshll.u32 %s125, 4
          %s134 = int_to_ptr.vmem [resolvable:$true] %s133
          %136 = dma.hbm_to_vmem [thread:$0]  %s131, 128, %s134, %s122
        $region24: #{tpu_custom_call.1} parent=19 // pred_fallthru
          _
      $region20: #{tpu_custom_call.1} parent=5 // pred_fallthru
        _
      %p137 = scmp.le.s32.totalorder 1, %s15
      %p138 = scmp.lt.s32.totalorder %s15, 3
      %p139 = pnand %p137, %p138
      %p140 = pneg %p139
      // Predicated region
      $region25: #{tpu_custom_call.1} parent=5 // pred_check
        _
      $region26: #{tpu_custom_call.1} parent=5 // pred_check_branch
        %142 = sbr.rel (%p139) target = $region28
      $region27: #{tpu_custom_call.1} parent=5 // pred_region
        %s143 = ssub.s32 %s15, 1
        %s144 = sand.u32 %s28, 1
        %s145 = scalar_lea.sflag [#allocation3], %s144
        %s146 = sand.u32 %s28, 1
        %s147 = smul.addr %s146, 8
        %s148 = scalar_lea.vmem [#allocation2], %s147
        // Predicated region
        $region29: #{tpu_custom_call.1} parent=27 // pred_check
          %p149 = pneg %p41
        $region30: #{tpu_custom_call.1} parent=27 // pred_check_branch
          %151 = sbr.rel (%p149) target = $region32
        $region31: #{tpu_custom_call.1} parent=27 // pred_region
          %152 = dma.done %s145, 128
        $region32: #{tpu_custom_call.1} parent=27 // pred_fallthru
          _
        // Predicated region
        $region33: #{tpu_custom_call.1} parent=27 // pred_check
          %p153 = pneg %p62
        $region34: #{tpu_custom_call.1} parent=27 // pred_check_branch
          %155 = sbr.rel (%p153) target = $region36
        $region35: #{tpu_custom_call.1} parent=27 // pred_region
          %156 = dma.done [#allocation6], 64
        $region36: #{tpu_custom_call.1} parent=27 // pred_fallthru
          _
        %s157 = sand.u32 %s28, 1
        %s158 = scalar_lea.sflag [#allocation3], %s157
        %s159 = sand.u32 %s28, 1
        %s160 = smul.addr %s159, 8
        %s161 = scalar_lea.vmem [#allocation2], %s160
        %p162 = pneg %p41
        %p163 = pneg %p38
        %p164 = pneg %p62
        %p165 = pneg %p59
        %p166 = pneg %p88
        %p167 = pneg %p85
        %s168 = sand.u32 %s75, 1
        %s169 = scalar_lea.sflag [#allocation4], %s168
        %s170 = sand.u32 %s75, 1
        %s171 = smul.addr %s170, 8
        %s172 = scalar_lea.vmem [#allocation7], %s171
        %v173 = vld [vmem:[%s148] sm:$0xff]
        %v174 = vand.u32 2147483647, %v173
        %v176 = vcombine.high %v174, %v174
        %vm178 = vcmask 1043456
        %v179 = vsel %vm178, %v174, 0.0
        %v180 = vsel %vm178, %v176, 0.0
        %v181 = vadd.f32 %v179, %v180
        %182 = vadd.xlane.f32.xlu0 %v181
        %v183 = vpop.xlane.xlu0 %182
        %v184 = vld [vmem:[#allocation5] sm:$0xf]
        %v186 = vlaneseq
        %v187 = vand.u32 %v186, 127
        %v188 = vlaneseq
        %v189 = vshrl.u32 %v188, 7
        %v190 = vsub.s32 %v187, %v189
        %v191 = vrot.slane %v183, %v190
        %vm192 = vcmask 31744
        %v193 = vsel %vm192, %v191, 0
        %v196 = vsel %vm192, %v184, 0
        %198 = vmatprep.subr.mxu0 0.0
        %v199 = vand.u32 %v196, 4294901760
        %200 = vmatpush1.xpose.msra.mxu0 %v199
        %201 = vmatprep.subr.mxu0 0.0
        %202 = vmatpush1.xpose.msra.mxu0 0.0
        %203 = vmatprep.subr.mxu0 0.0
        %204 = vmatpush1.xpose.msra.mxu0 0.0
        %205 = vmatprep.subr.mxu0 0.0
        %206 = vmatpush1.xpose.msra.mxu0 0.0
        %207 = vmatprep.subr.mxu0 0.0
        %208 = vmatpush1.xpose.msra.mxu0 0.0
        %209 = vmatprep.subr.mxu0 0.0
        %210 = vmatpush1.xpose.msra.mxu0 0.0
        %211 = vmatprep.subr.mxu0 0.0
        %212 = vmatpush1.xpose.msra.mxu0 0.0
        %213 = vmatprep.subr.mxu0 0.0
        %214 = vmatpush1.xpose.msra.mxu0 0.0
        %215 = vmatprep.subr.mxu0 0.0
        %216 = vmatpush1.xpose.msra.mxu0 0.0
        %217 = vmatprep.subr.mxu0 0.0
        %218 = vmatpush1.xpose.msra.mxu0 0.0
        %219 = vmatprep.subr.mxu0 0.0
        %220 = vmatpush1.xpose.msra.mxu0 0.0
        %221 = vmatprep.subr.mxu0 0.0
        %222 = vmatpush1.xpose.msra.mxu0 0.0
        %223 = vmatprep.subr.mxu0 0.0
        %224 = vmatpush1.xpose.msra.mxu0 0.0
        %225 = vmatprep.subr.mxu0 0.0
        %226 = vmatpush1.xpose.msra.mxu0 0.0
        %227 = vmatprep.subr.mxu0 0.0
        %228 = vmatpush1.xpose.msra.mxu0 0.0
        %229 = vmatprep.subr.mxu0 0.0
        %230 = vmatpush1.xpose.msra.mxu0 0.0
        %231 = vmatprep.subr.mxu0 0.0
        %232 = vmatpush1.xpose.msra.mxu0 0.0
        %233 = vmatprep.subr.mxu0 0.0
        %234 = vmatpush1.xpose.msra.mxu0 0.0
        %235 = vmatprep.subr.mxu0 0.0
        %236 = vmatpush1.xpose.msra.mxu0 0.0
        %237 = vmatprep.subr.mxu0 0.0
        %238 = vmatpush1.xpose.msra.mxu0 0.0
        %239 = vmatprep.subr.mxu0 0.0
        %240 = vmatpush1.xpose.msra.mxu0 0.0
        %241 = vmatprep.subr.mxu0 0.0
        %242 = vmatpush1.xpose.msra.mxu0 0.0
        %243 = vmatprep.subr.mxu0 0.0
        %244 = vmatpush1.xpose.msra.mxu0 0.0
        %245 = vmatprep.subr.mxu0 0.0
        %246 = vmatpush1.xpose.msra.mxu0 0.0
        %247 = vmatprep.subr.mxu0 0.0
        %248 = vmatpush1.xpose.msra.mxu0 0.0
        %249 = vmatprep.subr.mxu0 0.0
        %250 = vmatpush1.xpose.msra.mxu0 0.0
        %251 = vmatprep.subr.mxu0 0.0
        %252 = vmatpush1.xpose.msra.mxu0 0.0
        %253 = vmatprep.subr.mxu0 0.0
        %254 = vmatpush1.xpose.msra.mxu0 0.0
        %255 = vmatprep.subr.mxu0 0.0
        %256 = vmatpush1.xpose.msra.mxu0 0.0
        %257 = vmatprep.subr.mxu0 0.0
        %258 = vmatpush1.xpose.msra.mxu0 0.0
        %259 = vmatprep.subr.mxu0 0.0
        %260 = vmatpush1.xpose.msra.mxu0 0.0
        %261 = vmatprep.subr.mxu0 0.0
        %262 = vmatpush1.xpose.msra.mxu0 0.0
        %263 = vmatprep.mubr.f32.mxu0 0.0
        %v264 = vand.u32 %v193, 4294901760
        %v265 = vsub.f32 %v193, %v264
        %v266 = vand.u32 %v265, 4294901760
        %v267 = vsub.f32 %v265, %v266
        %v268 = vand.u32 %v267, 4294901760
        %269 = vmatmul.mubr.f32.gmra.mrb[0].mxu0 %v268
        %v270 = vpop.f32.mrb[0].mxu0
        %v271 = vadd.f32 0.0, %v270
        %v272 = vpop.f32.mrb[0].mxu0
        %273 = vdwg.mxu0
        %274 = vmatprep.subr.mxu0 0.0
        %v275 = vand.u32 %v196, 4294901760
        %v276 = vsub.f32 %v196, %v275
        %v277 = vand.u32 %v276, 4294901760
        %v278 = vsub.f32 %v276, %v277
        %v279 = vand.u32 %v278, 4294901760
        %280 = vmatpush1.xpose.msra.mxu0 %v279
        %281 = vmatprep.subr.mxu0 0.0
        %282 = vmatpush1.xpose.msra.mxu0 0.0
        %283 = vmatprep.subr.mxu0 0.0
        %284 = vmatpush1.xpose.msra.mxu0 0.0
        %285 = vmatprep.subr.mxu0 0.0
        %286 = vmatpush1.xpose.msra.mxu0 0.0
        %287 = vmatprep.subr.mxu0 0.0
        %288 = vmatpush1.xpose.msra.mxu0 0.0
        %289 = vmatprep.subr.mxu0 0.0
        %290 = vmatpush1.xpose.msra.mxu0 0.0
        %291 = vmatprep.subr.mxu0 0.0
        %292 = vmatpush1.xpose.msra.mxu0 0.0
        %293 = vmatprep.subr.mxu0 0.0
        %294 = vmatpush1.xpose.msra.mxu0 0.0
        %295 = vmatprep.subr.mxu0 0.0
        %296 = vmatpush1.xpose.msra.mxu0 0.0
        %297 = vmatprep.subr.mxu0 0.0
        %298 = vmatpush1.xpose.msra.mxu0 0.0
        %299 = vmatprep.subr.mxu0 0.0
        %300 = vmatpush1.xpose.msra.mxu0 0.0
        %301 = vmatprep.subr.mxu0 0.0
        %302 = vmatpush1.xpose.msra.mxu0 0.0
        %303 = vmatprep.subr.mxu0 0.0
        %304 = vmatpush1.xpose.msra.mxu0 0.0
        %305 = vmatprep.subr.mxu0 0.0
        %306 = vmatpush1.xpose.msra.mxu0 0.0
        %307 = vmatprep.subr.mxu0 0.0
        %308 = vmatpush1.xpose.msra.mxu0 0.0
        %309 = vmatprep.subr.mxu0 0.0
        %310 = vmatpush1.xpose.msra.mxu0 0.0
        %311 = vmatprep.subr.mxu0 0.0
        %312 = vmatpush1.xpose.msra.mxu0 0.0
        %313 = vmatprep.subr.mxu0 0.0
        %314 = vmatpush1.xpose.msra.mxu0 0.0
        %315 = vmatprep.subr.mxu0 0.0
        %316 = vmatpush1.xpose.msra.mxu0 0.0
        %317 = vmatprep.subr.mxu0 0.0
        %318 = vmatpush1.xpose.msra.mxu0 0.0
        %319 = vmatprep.subr.mxu0 0.0
        %320 = vmatpush1.xpose.msra.mxu0 0.0
        %321 = vmatprep.subr.mxu0 0.0
        %322 = vmatpush1.xpose.msra.mxu0 0.0
        %323 = vmatprep.subr.mxu0 0.0
        %324 = vmatpush1.xpose.msra.mxu0 0.0
        %325 = vmatprep.subr.mxu0 0.0
        %326 = vmatpush1.xpose.msra.mxu0 0.0
        %327 = vmatprep.subr.mxu0 0.0
        %328 = vmatpush1.xpose.msra.mxu0 0.0
        %329 = vmatprep.subr.mxu0 0.0
        %330 = vmatpush1.xpose.msra.mxu0 0.0
        %331 = vmatprep.subr.mxu0 0.0
        %332 = vmatpush1.xpose.msra.mxu0 0.0
        %333 = vmatprep.subr.mxu0 0.0
        %334 = vmatpush1.xpose.msra.mxu0 0.0
        %335 = vmatprep.subr.mxu0 0.0
        %336 = vmatpush1.xpose.msra.mxu0 0.0
        %337 = vmatprep.subr.mxu0 0.0
        %338 = vmatpush1.xpose.msra.mxu0 0.0
        %339 = vmatprep.subr.mxu0 0.0
        %340 = vmatpush1.xpose.msra.mxu0 0.0
        %341 = vmatprep.subr.mxu0 0.0
        %342 = vmatpush1.xpose.msra.mxu0 0.0
        %343 = vmatprep.mubr.f32.mxu0 0.0
        %v344 = vand.u32 %v193, 4294901760
        %345 = vmatmul.mubr.f32.gmra.mrb[0].mxu0 %v344
        %v346 = vpop.f32.mrb[0].mxu0
        %v347 = vadd.f32 %v271, %v346
        %v348 = vpop.f32.mrb[0].mxu0
        %349 = vdwg.mxu0
        %350 = vmatprep.subr.mxu0 0.0
        %v351 = vand.u32 %v196, 4294901760
        %v352 = vsub.f32 %v196, %v351
        %353 = vmatpush1.xpose.msra.mxu0 %v352
        %354 = vmatprep.subr.mxu0 0.0
        %355 = vmatpush1.xpose.msra.mxu0 0.0
        %356 = vmatprep.subr.mxu0 0.0
        %357 = vmatpush1.xpose.msra.mxu0 0.0
        %358 = vmatprep.subr.mxu0 0.0
        %359 = vmatpush1.xpose.msra.mxu0 0.0
        %360 = vmatprep.subr.mxu0 0.0
        %361 = vmatpush1.xpose.msra.mxu0 0.0
        %362 = vmatprep.subr.mxu0 0.0
        %363 = vmatpush1.xpose.msra.mxu0 0.0
        %364 = vmatprep.subr.mxu0 0.0
        %365 = vmatpush1.xpose.msra.mxu0 0.0
        %366 = vmatprep.subr.mxu0 0.0
        %367 = vmatpush1.xpose.msra.mxu0 0.0
        %368 = vmatprep.subr.mxu0 0.0
        %369 = vmatpush1.xpose.msra.mxu0 0.0
        %370 = vmatprep.subr.mxu0 0.0
        %371 = vmatpush1.xpose.msra.mxu0 0.0
        %372 = vmatprep.subr.mxu0 0.0
        %373 = vmatpush1.xpose.msra.mxu0 0.0
        %374 = vmatprep.subr.mxu0 0.0
        %375 = vmatpush1.xpose.msra.mxu0 0.0
        %376 = vmatprep.subr.mxu0 0.0
        %377 = vmatpush1.xpose.msra.mxu0 0.0
        %378 = vmatprep.subr.mxu0 0.0
        %379 = vmatpush1.xpose.msra.mxu0 0.0
        %380 = vmatprep.subr.mxu0 0.0
        %381 = vmatpush1.xpose.msra.mxu0 0.0
        %382 = vmatprep.subr.mxu0 0.0
        %383 = vmatpush1.xpose.msra.mxu0 0.0
        %384 = vmatprep.subr.mxu0 0.0
        %385 = vmatpush1.xpose.msra.mxu0 0.0
        %386 = vmatprep.subr.mxu0 0.0
        %387 = vmatpush1.xpose.msra.mxu0 0.0
        %388 = vmatprep.subr.mxu0 0.0
        %389 = vmatpush1.xpose.msra.mxu0 0.0
        %390 = vmatprep.subr.mxu0 0.0
        %391 = vmatpush1.xpose.msra.mxu0 0.0
        %392 = vmatprep.subr.mxu0 0.0
        %393 = vmatpush1.xpose.msra.mxu0 0.0
        %394 = vmatprep.subr.mxu0 0.0
        %395 = vmatpush1.xpose.msra.mxu0 0.0
        %396 = vmatprep.subr.mxu0 0.0
        %397 = vmatpush1.xpose.msra.mxu0 0.0
        %398 = vmatprep.subr.mxu0 0.0
        %399 = vmatpush1.xpose.msra.mxu0 0.0
        %400 = vmatprep.subr.mxu0 0.0
        %401 = vmatpush1.xpose.msra.mxu0 0.0
        %402 = vmatprep.subr.mxu0 0.0
        %403 = vmatpush1.xpose.msra.mxu0 0.0
        %404 = vmatprep.subr.mxu0 0.0
        %405 = vmatpush1.xpose.msra.mxu0 0.0
        %406 = vmatprep.subr.mxu0 0.0
        %407 = vmatpush1.xpose.msra.mxu0 0.0
        %408 = vmatprep.subr.mxu0 0.0
        %409 = vmatpush1.xpose.msra.mxu0 0.0
        %410 = vmatprep.subr.mxu0 0.0
        %411 = vmatpush1.xpose.msra.mxu0 0.0
        %412 = vmatprep.subr.mxu0 0.0
        %413 = vmatpush1.xpose.msra.mxu0 0.0
        %414 = vmatprep.subr.mxu0 0.0
        %415 = vmatpush1.xpose.msra.mxu0 0.0
        %416 = vmatprep.mubr.f32.mxu0 0.0
        %v417 = vand.u32 %v193, 4294901760
        %v418 = vsub.f32 %v193, %v417
        %419 = vmatmul.mubr.f32.gmra.mrb[0].mxu0 %v418
        %v420 = vpop.f32.mrb[0].mxu0
        %v421 = vadd.f32 %v347, %v420
        %v422 = vpop.f32.mrb[0].mxu0
        %423 = vdwg.mxu0
        %424 = vmatprep.subr.mxu0 0.0
        %v425 = vand.u32 %v196, 4294901760
        %426 = vmatpush1.xpose.msra.mxu0 %v425
        %427 = vmatprep.subr.mxu0 0.0
        %428 = vmatpush1.xpose.msra.mxu0 0.0
        %429 = vmatprep.subr.mxu0 0.0
        %430 = vmatpush1.xpose.msra.mxu0 0.0
        %431 = vmatprep.subr.mxu0 0.0
        %432 = vmatpush1.xpose.msra.mxu0 0.0
        %433 = vmatprep.subr.mxu0 0.0
        %434 = vmatpush1.xpose.msra.mxu0 0.0
        %435 = vmatprep.subr.mxu0 0.0
        %436 = vmatpush1.xpose.msra.mxu0 0.0
        %437 = vmatprep.subr.mxu0 0.0
        %438 = vmatpush1.xpose.msra.mxu0 0.0
        %439 = vmatprep.subr.mxu0 0.0
        %440 = vmatpush1.xpose.msra.mxu0 0.0
        %441 = vmatprep.subr.mxu0 0.0
        %442 = vmatpush1.xpose.msra.mxu0 0.0
        %443 = vmatprep.subr.mxu0 0.0
        %444 = vmatpush1.xpose.msra.mxu0 0.0
        %445 = vmatprep.subr.mxu0 0.0
        %446 = vmatpush1.xpose.msra.mxu0 0.0
        %447 = vmatprep.subr.mxu0 0.0
        %448 = vmatpush1.xpose.msra.mxu0 0.0
        %449 = vmatprep.subr.mxu0 0.0
        %450 = vmatpush1.xpose.msra.mxu0 0.0
        %451 = vmatprep.subr.mxu0 0.0
        %452 = vmatpush1.xpose.msra.mxu0 0.0
        %453 = vmatprep.subr.mxu0 0.0
        %454 = vmatpush1.xpose.msra.mxu0 0.0
        %455 = vmatprep.subr.mxu0 0.0
        %456 = vmatpush1.xpose.msra.mxu0 0.0
        %457 = vmatprep.subr.mxu0 0.0
        %458 = vmatpush1.xpose.msra.mxu0 0.0
        %459 = vmatprep.subr.mxu0 0.0
        %460 = vmatpush1.xpose.msra.mxu0 0.0
        %461 = vmatprep.subr.mxu0 0.0
        %462 = vmatpush1.xpose.msra.mxu0 0.0
        %463 = vmatprep.subr.mxu0 0.0
        %464 = vmatpush1.xpose.msra.mxu0 0.0
        %465 = vmatprep.subr.mxu0 0.0
        %466 = vmatpush1.xpose.msra.mxu0 0.0
        %467 = vmatprep.subr.mxu0 0.0
        %468 = vmatpush1.xpose.msra.mxu0 0.0
        %469 = vmatprep.subr.mxu0 0.0
        %470 = vmatpush1.xpose.msra.mxu0 0.0
        %471 = vmatprep.subr.mxu0 0.0
        %472 = vmatpush1.xpose.msra.mxu0 0.0
        %473 = vmatprep.subr.mxu0 0.0
        %474 = vmatpush1.xpose.msra.mxu0 0.0
        %475 = vmatprep.subr.mxu0 0.0
        %476 = vmatpush1.xpose.msra.mxu0 0.0
        %477 = vmatprep.subr.mxu0 0.0
        %478 = vmatpush1.xpose.msra.mxu0 0.0
        %479 = vmatprep.subr.mxu0 0.0
        %480 = vmatpush1.xpose.msra.mxu0 0.0
        %481 = vmatprep.subr.mxu0 0.0
        %482 = vmatpush1.xpose.msra.mxu0 0.0
        %483 = vmatprep.subr.mxu0 0.0
        %484 = vmatpush1.xpose.msra.mxu0 0.0
        %485 = vmatprep.subr.mxu0 0.0
        %486 = vmatpush1.xpose.msra.mxu0 0.0
        %487 = vmatprep.subr.mxu0 0.0
        %488 = vmatpush1.xpose.msra.mxu0 0.0
        %489 = vmatprep.mubr.f32.mxu0 0.0
        %v490 = vand.u32 %v193, 4294901760
        %v491 = vsub.f32 %v193, %v490
        %v492 = vand.u32 %v491, 4294901760
        %493 = vmatmul.mubr.f32.gmra.mrb[0].mxu0 %v492
        %v494 = vpop.f32.mrb[0].mxu0
        %v495 = vadd.f32 %v421, %v494
        %v496 = vpop.f32.mrb[0].mxu0
        %497 = vdwg.mxu0
        %498 = vmatprep.subr.mxu0 0.0
        %v499 = vand.u32 %v196, 4294901760
        %v500 = vsub.f32 %v196, %v499
        %v501 = vand.u32 %v500, 4294901760
        %502 = vmatpush1.xpose.msra.mxu0 %v501
        %503 = vmatprep.subr.mxu0 0.0
        %504 = vmatpush1.xpose.msra.mxu0 0.0
        %505 = vmatprep.subr.mxu0 0.0
        %506 = vmatpush1.xpose.msra.mxu0 0.0
        %507 = vmatprep.subr.mxu0 0.0
        %508 = vmatpush1.xpose.msra.mxu0 0.0
        %509 = vmatprep.subr.mxu0 0.0
        %510 = vmatpush1.xpose.msra.mxu0 0.0
        %511 = vmatprep.subr.mxu0 0.0
        %512 = vmatpush1.xpose.msra.mxu0 0.0
        %513 = vmatprep.subr.mxu0 0.0
        %514 = vmatpush1.xpose.msra.mxu0 0.0
        %515 = vmatprep.subr.mxu0 0.0
        %516 = vmatpush1.xpose.msra.mxu0 0.0
        %517 = vmatprep.subr.mxu0 0.0
        %518 = vmatpush1.xpose.msra.mxu0 0.0
        %519 = vmatprep.subr.mxu0 0.0
        %520 = vmatpush1.xpose.msra.mxu0 0.0
        %521 = vmatprep.subr.mxu0 0.0
        %522 = vmatpush1.xpose.msra.mxu0 0.0
        %523 = vmatprep.subr.mxu0 0.0
        %524 = vmatpush1.xpose.msra.mxu0 0.0
        %525 = vmatprep.subr.mxu0 0.0
        %526 = vmatpush1.xpose.msra.mxu0 0.0
        %527 = vmatprep.subr.mxu0 0.0
        %528 = vmatpush1.xpose.msra.mxu0 0.0
        %529 = vmatprep.subr.mxu0 0.0
        %530 = vmatpush1.xpose.msra.mxu0 0.0
        %531 = vmatprep.subr.mxu0 0.0
        %532 = vmatpush1.xpose.msra.mxu0 0.0
        %533 = vmatprep.subr.mxu0 0.0
        %534 = vmatpush1.xpose.msra.mxu0 0.0
        %535 = vmatprep.subr.mxu0 0.0
        %536 = vmatpush1.xpose.msra.mxu0 0.0
        %537 = vmatprep.subr.mxu0 0.0
        %538 = vmatpush1.xpose.msra.mxu0 0.0
        %539 = vmatprep.subr.mxu0 0.0
        %540 = vmatpush1.xpose.msra.mxu0 0.0
        %541 = vmatprep.subr.mxu0 0.0
        %542 = vmatpush1.xpose.msra.mxu0 0.0
        %543 = vmatprep.subr.mxu0 0.0
        %544 = vmatpush1.xpose.msra.mxu0 0.0
        %545 = vmatprep.subr.mxu0 0.0
        %546 = vmatpush1.xpose.msra.mxu0 0.0
        %547 = vmatprep.subr.mxu0 0.0
        %548 = vmatpush1.xpose.msra.mxu0 0.0
        %549 = vmatprep.subr.mxu0 0.0
        %550 = vmatpush1.xpose.msra.mxu0 0.0
        %551 = vmatprep.subr.mxu0 0.0
        %552 = vmatpush1.xpose.msra.mxu0 0.0
        %553 = vmatprep.subr.mxu0 0.0
        %554 = vmatpush1.xpose.msra.mxu0 0.0
        %555 = vmatprep.subr.mxu0 0.0
        %556 = vmatpush1.xpose.msra.mxu0 0.0
        %557 = vmatprep.subr.mxu0 0.0
        %558 = vmatpush1.xpose.msra.mxu0 0.0
        %559 = vmatprep.subr.mxu0 0.0
        %560 = vmatpush1.xpose.msra.mxu0 0.0
        %561 = vmatprep.subr.mxu0 0.0
        %562 = vmatpush1.xpose.msra.mxu0 0.0
        %563 = vmatprep.subr.mxu0 0.0
        %564 = vmatpush1.xpose.msra.mxu0 0.0
        %565 = vmatprep.mubr.f32.mxu0 0.0
        %v566 = vand.u32 %v193, 4294901760
        %567 = vmatmul.mubr.f32.gmra.mrb[0].mxu0 %v566
        %v568 = vpop.f32.mrb[0].mxu0
        %v569 = vadd.f32 %v495, %v568
        %v570 = vpop.f32.mrb[0].mxu0
        %571 = vdwg.mxu0
        %572 = vmatprep.subr.mxu0 0.0
        %v573 = vand.u32 %v196, 4294901760
        %574 = vmatpush1.xpose.msra.mxu0 %v573
        %575 = vmatprep.subr.mxu0 0.0
        %576 = vmatpush1.xpose.msra.mxu0 0.0
        %577 = vmatprep.subr.mxu0 0.0
        %578 = vmatpush1.xpose.msra.mxu0 0.0
        %579 = vmatprep.subr.mxu0 0.0
        %580 = vmatpush1.xpose.msra.mxu0 0.0
        %581 = vmatprep.subr.mxu0 0.0
        %582 = vmatpush1.xpose.msra.mxu0 0.0
        %583 = vmatprep.subr.mxu0 0.0
        %584 = vmatpush1.xpose.msra.mxu0 0.0
        %585 = vmatprep.subr.mxu0 0.0
        %586 = vmatpush1.xpose.msra.mxu0 0.0
        %587 = vmatprep.subr.mxu0 0.0
        %588 = vmatpush1.xpose.msra.mxu0 0.0
        %589 = vmatprep.subr.mxu0 0.0
        %590 = vmatpush1.xpose.msra.mxu0 0.0
        %591 = vmatprep.subr.mxu0 0.0
        %592 = vmatpush1.xpose.msra.mxu0 0.0
        %593 = vmatprep.subr.mxu0 0.0
        %594 = vmatpush1.xpose.msra.mxu0 0.0
        %595 = vmatprep.subr.mxu0 0.0
        %596 = vmatpush1.xpose.msra.mxu0 0.0
        %597 = vmatprep.subr.mxu0 0.0
        %598 = vmatpush1.xpose.msra.mxu0 0.0
        %599 = vmatprep.subr.mxu0 0.0
        %600 = vmatpush1.xpose.msra.mxu0 0.0
        %601 = vmatprep.subr.mxu0 0.0
        %602 = vmatpush1.xpose.msra.mxu0 0.0
        %603 = vmatprep.subr.mxu0 0.0
        %604 = vmatpush1.xpose.msra.mxu0 0.0
        %605 = vmatprep.subr.mxu0 0.0
        %606 = vmatpush1.xpose.msra.mxu0 0.0
        %607 = vmatprep.subr.mxu0 0.0
        %608 = vmatpush1.xpose.msra.mxu0 0.0
        %609 = vmatprep.subr.mxu0 0.0
        %610 = vmatpush1.xpose.msra.mxu0 0.0
        %611 = vmatprep.subr.mxu0 0.0
        %612 = vmatpush1.xpose.msra.mxu0 0.0
        %613 = vmatprep.subr.mxu0 0.0
        %614 = vmatpush1.xpose.msra.mxu0 0.0
        %615 = vmatprep.subr.mxu0 0.0
        %616 = vmatpush1.xpose.msra.mxu0 0.0
        %617 = vmatprep.subr.mxu0 0.0
        %618 = vmatpush1.xpose.msra.mxu0 0.0
        %619 = vmatprep.subr.mxu0 0.0
        %620 = vmatpush1.xpose.msra.mxu0 0.0
        %621 = vmatprep.subr.mxu0 0.0
        %622 = vmatpush1.xpose.msra.mxu0 0.0
        %623 = vmatprep.subr.mxu0 0.0
        %624 = vmatpush1.xpose.msra.mxu0 0.0
        %625 = vmatprep.subr.mxu0 0.0
        %626 = vmatpush1.xpose.msra.mxu0 0.0
        %627 = vmatprep.subr.mxu0 0.0
        %628 = vmatpush1.xpose.msra.mxu0 0.0
        %629 = vmatprep.subr.mxu0 0.0
        %630 = vmatpush1.xpose.msra.mxu0 0.0
        %631 = vmatprep.subr.mxu0 0.0
        %632 = vmatpush1.xpose.msra.mxu0 0.0
        %633 = vmatprep.subr.mxu0 0.0
        %634 = vmatpush1.xpose.msra.mxu0 0.0
        %635 = vmatprep.subr.mxu0 0.0
        %636 = vmatpush1.xpose.msra.mxu0 0.0
        %637 = vmatprep.mubr.f32.mxu0 0.0
        %v638 = vand.u32 %v193, 4294901760
        %639 = vmatmul.mubr.f32.gmra.mrb[0].mxu0 %v638
        %v640 = vpop.f32.mrb[0].mxu0
        %v641 = vadd.f32 %v569, %v640
        %v642 = vpop.f32.mrb[0].mxu0
        %643 = vdwg.mxu0
        %v644 = vxor.u32 %v641, 2147483648
        %v645 = vmul.f32 %v644, 1.442695
        %v646 = vpow.pop %v645
        %v647 = vadd.f32 %v646, 1.0
        %v648 = vrcp.pop %v647
        %v649 = vmul.f32 1.0, %v648
        %v650 = vlaneseq
        %v651 = vshrl.u32 %v650, 7
        %v652 = vsub.s32 0, %v651
        %v653 = vrot.slane %v649, %v652
        %655 = vbcast.lane.b32.xlu0 %v653, 256
        %v656 = vpop.permute.xlu0 %655
        %v658 = vcombine.high %v173, %v173
        %v660 = vmul.f32 %v656, %v173
        %v661 = vmul.f32 %v656, %v658
        %v664 = vcombine.low %v660, %v661
        %666 = vst [vmem:[%s172] sm:$0xff] %v664
        %s667 = sand.u32 %s75, 1
        %s668 = scalar_lea.sflag [#allocation4], %s667
        %s669 = sand.u32 %s75, 1
        %s670 = smul.addr %s669, 8
        %s671 = scalar_lea.vmem [#allocation7], %s670
        // Predicated region
        $region37: #{tpu_custom_call.1} parent=27 // pred_check
          %p672 = pneg %p85
        $region38: #{tpu_custom_call.1} parent=27 // pred_check_branch
          %674 = sbr.rel (%p672) target = $region40
        $region39: #{tpu_custom_call.1} parent=27 // pred_region
          %s676 = ssub.s32 128, 128
          %677 = vsyncadd %s668, %s676
          %s678 = smul.addr %s20, 2
          %s679 = smul.addr %s678, 64
          %s680 = scalar_lea.hbm %s2, %s679
          %s682 = sshll.u32 %s671, 4
          %s683 = int_to_ptr.vmem [resolvable:$true] %s682
          %685 = dma.vmem_to_hbm [thread:$0]  %s683, 128, %s680, %s668
        $region40: #{tpu_custom_call.1} parent=27 // pred_fallthru
          _
      $region28: #{tpu_custom_call.1} parent=5 // pred_fallthru
        _
      %p686 = scmp.le.s32.totalorder 2, %s15
      // Predicated region
      $region41: #{tpu_custom_call.1} parent=5 // pred_check
        %p687 = pneg %p686
      $region42: #{tpu_custom_call.1} parent=5 // pred_check_branch
        %689 = sbr.rel (%p687) target = $region44
      $region43: #{tpu_custom_call.1} parent=5 // pred_region
        %s690 = ssub.s32 %s15, 2
        // Predicated region
        $region45: #{tpu_custom_call.1} parent=43 // pred_check
          %p691 = pneg %p91
        $region46: #{tpu_custom_call.1} parent=43 // pred_check_branch
          %693 = sbr.rel (%p691) target = $region48
        $region47: #{tpu_custom_call.1} parent=43 // pred_region
          %s694 = sand.u32 %s76, 1
          %s695 = scalar_lea.sflag [#allocation4], %s694
          %s696 = sand.u32 %s76, 1
          %s697 = smul.addr %s696, 8
          %s698 = scalar_lea.vmem [#allocation7], %s697
          %699 = dma.done %s695, 128
        $region48: #{tpu_custom_call.1} parent=43 // pred_fallthru
          _
      $region44: #{tpu_custom_call.1} parent=5 // pred_fallthru
        _
    $region6: #{tpu_custom_call.1} parent=1 // loop_footer
      %s19 = sadd.s32 1, %s15
    $region7: #{tpu_custom_call.1} parent=1 // loop_footer_branch
      %14 = sbr.rel target = $region3
    $region8: #{tpu_custom_call.1} parent=1 // loop_exit
      _
    %700 = vsyncpa [#allocation3], 1
    %s701 = scalar_lea.sflag [#allocation3], 1
    %702 = vsyncpa %s701, 1
    %703 = vsyncpa [#allocation6], 1
    %704 = vsyncpa [#allocation4], 1
    %s705 = scalar_lea.sflag [#allocation4], 1
    %706 = vsyncpa %s705, 1

</llo_original>
